<compile_context>
chip_gen: v5e
topology: v5e:2x2
jax: 0.10.0
libtpu: 0.0.40
codegen_flags: <defaults>
</compile_context>

<pallas_src>
import functools

import jax
import jax.numpy as jnp
from jax.experimental import pallas as pl
from jax.experimental.pallas import tpu as pltpu

EPS = 1e-5
_LANE = 128


def _round_up(n, m):
    return ((n + m - 1) // m) * m


def _pick_tile_n(n, length):
    """Largest divisor of n with tile rows (tn*L) <= ~1024; prefers leaving >=2 grid
    steps (v7x has 2 TensorCores) when the smaller tile is still M-dense (>=512 rows)."""
    cap = max(1, 1024 // max(length, 1))
    divs = [d for d in range(1, n + 1) if n % d == 0 and d <= cap]
    tn = max(divs)
    if tn == n and n > 1:
        for d in reversed(divs[:-1]):
            if d * length >= 512:
                return d
    return tn


def _compiler_params(block_bytes):
    # double-buffered blocks + headroom; floor = 32 MiB scoped default, cap = v7x VMEM (64 MiB)
    limit = int(min(max(2 * block_bytes + (4 << 20), 32 << 20), 64 << 20))
    return pltpu.CompilerParams(dimension_semantics=("parallel",),
                                vmem_limit_bytes=limit)


def _shifted_taps(x):
    """x: (TN, L, C) f32 -> (x[l-1], x[l+1]) with zero boundary rows per sample.

    XLU sublane rolls + an iota mask keep the halo in registers (no concatenate copies)."""
    length = x.shape[1]
    row = jax.lax.broadcasted_iota(jnp.int32, x.shape, dimension=1)
    x_prev = jnp.where(row == 0, 0.0, pltpu.roll(x, shift=1, axis=1))
    x_next = jnp.where(row == length - 1, 0.0, pltpu.roll(x, shift=length - 1, axis=1))
    return x_prev, x_next


def _conv_stage_kernel(*refs, pre_affine):
    """One (TN, L) tile: [optional folded-BN + ReLU] -> k=3 conv as three accumulating
    bf16 MXU matmuls (f32 acc) -> bf16 conv output + per-tile BN [sum, sumsq] stats."""
    if pre_affine:
        x_ref, w_ref, sc_ref, sh_ref, h_ref, stats_ref = refs
    else:
        x_ref, w_ref, h_ref, stats_ref = refs

    x = x_ref[...].astype(jnp.float32)                       # (TN, L, Cin_p)
    if pre_affine:                                           # previous BN folded to scale/shift
        x = jnp.maximum(x * sc_ref[...] + sh_ref[...], 0.0)

    x_prev, x_next = _shifted_taps(x)
    dn = (((2,), (0,)), ((), ()))                            # contract channel dim
    h = jax.lax.dot_general(x_prev.astype(jnp.bfloat16), w_ref[0], dn,
                            preferred_element_type=jnp.float32)
    h = h + jax.lax.dot_general(x.astype(jnp.bfloat16), w_ref[1], dn,
                                preferred_element_type=jnp.float32)
    h = h + jax.lax.dot_general(x_next.astype(jnp.bfloat16), w_ref[2], dn,
                                preferred_element_type=jnp.float32)

    h_ref[...] = h.astype(h_ref.dtype)                       # bf16 HBM intermediate
    s = jnp.sum(h, axis=(0, 1), keepdims=True)               # (1, 1, Cout_p), f32
    ss = jnp.sum(h * h, axis=(0, 1), keepdims=True)
    stats_ref[...] = jnp.concatenate([s, ss], axis=1)        # (1, 2, Cout_p)


def _finalize_kernel(*refs, project):
    """One tile: folded BN2 (scale/shift) + residual add (+ optional 1x1 projection) + ReLU."""
    if project:
        h2_ref, sc_ref, sh_ref, x_ref, wr_ref, br_ref, out_ref = refs
        dn = (((2,), (0,)), ((), ()))
        res = jax.lax.dot_general(x_ref[...].astype(jnp.bfloat16), wr_ref[...], dn,
                                  preferred_element_type=jnp.float32) + br_ref[...]
    else:
        h2_ref, sc_ref, sh_ref, x_ref, out_ref = refs
        res = x_ref[...]                                     # identity shortcut: no matmul
    out_ref[...] = jnp.maximum(
        h2_ref[...].astype(jnp.float32) * sc_ref[...] + sh_ref[...] + res, 0.0)


def _conv_stage(x, w_taps, pre_scale=None, pre_shift=None):
    """x: (N, L, Cin_p), w_taps: (3, Cin_p, Cout_p) bf16 -> (h bf16 (N,L,Cout_p), stats f32)."""
    n, length, cin_p = x.shape
    cout_p = w_taps.shape[2]
    tn = _pick_tile_n(n, length)
    grid = (n // tn,)
    pre_affine = pre_scale is not None
    kernel = functools.partial(_conv_stage_kernel, pre_affine=pre_affine)

    in_specs = [pl.BlockSpec((tn, length, cin_p), lambda i: (i, 0, 0)),
                pl.BlockSpec((3, cin_p, cout_p), lambda i: (0, 0, 0))]
    inputs = [x, w_taps]
    if pre_affine:
        in_specs += [pl.BlockSpec((1, 1, cin_p), lambda i: (0, 0, 0)),
                     pl.BlockSpec((1, 1, cin_p), lambda i: (0, 0, 0))]
        inputs += [pre_scale, pre_shift]

    block_bytes = (tn * length * cin_p * x.dtype.itemsize + 3 * cin_p * cout_p * 2
                   + tn * length * cout_p * 2 + 2 * cout_p * 4
                   + (2 * cin_p * 4 if pre_affine else 0))
    cost = pl.CostEstimate(
        flops=2 * 3 * n * length * cin_p * cout_p, transcendentals=0,
        bytes_accessed=int(n * length * cin_p) * x.dtype.itemsize
                       + 3 * cin_p * cout_p * 2 + n * length * cout_p * 2
                       + grid[0] * 2 * cout_p * 4)

    return pl.pallas_call(
        kernel,
        grid=grid,
        in_specs=in_specs,
        out_specs=(pl.BlockSpec((tn, length, cout_p), lambda i: (i, 0, 0)),
                   pl.BlockSpec((1, 2, cout_p), lambda i: (i, 0, 0))),
        out_shape=(jax.ShapeDtypeStruct((n, length, cout_p), jnp.bfloat16),
                   jax.ShapeDtypeStruct((grid[0], 2, cout_p), jnp.float32)),
        compiler_params=_compiler_params(block_bytes),
        cost_estimate=cost,
    )(*inputs)


def _fold_bn(stats, gamma_p, beta_p, count):
    """O(C) glue: training-mode BN(h) == h * scale + shift from accumulated [sum, sumsq]."""
    tot = jnp.sum(stats, axis=0)                             # (2, Cp)
    mean = tot[0] / count
    var = tot[1] / count - mean * mean                       # biased variance (training-mode BN)
    scale = gamma_p * jax.lax.rsqrt(var + EPS)
    shift = beta_p - mean * scale
    cp = scale.shape[0]
    return scale.reshape(1, 1, cp), shift.reshape(1, 1, cp)


def _finalize(h2, scale2, shift2, x_p, wr_p, br_p):
    n, length, cout_p = h2.shape
    cin_p = x_p.shape[-1]
    tn = _pick_tile_n(n, length)
    grid = (n // tn,)
    project = wr_p is not None
    kernel = functools.partial(_finalize_kernel, project=project)

    in_specs = [pl.BlockSpec((tn, length, cout_p), lambda i: (i, 0, 0)),
                pl.BlockSpec((1, 1, cout_p), lambda i: (0, 0, 0)),
                pl.BlockSpec((1, 1, cout_p), lambda i: (0, 0, 0)),
                pl.BlockSpec((tn, length, cin_p), lambda i: (i, 0, 0))]
    inputs = [h2, scale2, shift2, x_p]
    flops = 4 * n * length * cout_p
    block_bytes = tn * length * (cout_p * 2 + cin_p * 4 + cout_p * 4) + 4 * cout_p * 4
    if project:
        in_specs += [pl.BlockSpec((cin_p, cout_p), lambda i: (0, 0)),
                     pl.BlockSpec((1, 1, cout_p), lambda i: (0, 0, 0))]
        inputs += [wr_p, br_p]
        flops += 2 * n * length * cin_p * cout_p
        block_bytes += cin_p * cout_p * 2 + cout_p * 4

    cost = pl.CostEstimate(flops=flops, transcendentals=0,
                           bytes_accessed=n * length * (cout_p * 2 + cin_p * 4 + cout_p * 4))

    return pl.pallas_call(
        kernel,
        grid=grid,
        in_specs=in_specs,
        out_specs=pl.BlockSpec((tn, length, cout_p), lambda i: (i, 0, 0)),
        out_shape=jax.ShapeDtypeStruct((n, length, cout_p), jnp.float32),
        compiler_params=_compiler_params(block_bytes),
        cost_estimate=cost,
    )(*inputs)


def residual_block(x, params):
    """x: (N, C_in, L) float32 (PyTorch NCL layout). Returns (N, C_out, L) float32."""
    w1, b1, g1, bt1, w2, b2, g2, bt2, wr, br = params
    del b1, b2  # conv bias before training-mode BatchNorm is absorbed by the mean
    n, cin, length = x.shape
    cout = w1.shape[0]
    cin_p = _round_up(cin, _LANE)
    cout_p = _round_up(cout, _LANE)

    # layout glue: channels -> lanes, zero-pad to 128-lane density (see module TODO above).
    x_nlc = jnp.transpose(x, (0, 2, 1)).astype(jnp.float32)
    x_p = jnp.pad(x_nlc, ((0, 0), (0, 0), (0, cin_p - cin)))

    def pad_taps(w, ci_p, co_p):
        t = jnp.transpose(w, (2, 1, 0))                      # (3, Cin, Cout)
        t = jnp.pad(t, ((0, 0), (0, ci_p - t.shape[1]), (0, co_p - t.shape[2])))
        return t.astype(jnp.bfloat16)

    def pad_vec(v, cp):
        return jnp.pad(v.astype(jnp.float32), (0, cp - v.shape[0]))

    w1_t = pad_taps(w1, cin_p, cout_p)
    w2_t = pad_taps(w2, cout_p, cout_p)
    g1_p, bt1_p = pad_vec(g1, cout_p), pad_vec(bt1, cout_p)
    g2_p, bt2_p = pad_vec(g2, cout_p), pad_vec(bt2, cout_p)

    # stage 1: conv1 + per-tile BN1 statistics
    h1, st1 = _conv_stage(x_p, w1_t)
    scale1, shift1 = _fold_bn(st1, g1_p, bt1_p, n * length)

    # stage 2: folded BN1 + ReLU, then conv2 + per-tile BN2 statistics
    h2, st2 = _conv_stage(h1, w2_t, pre_scale=scale1, pre_shift=shift1)
    scale2, shift2 = _fold_bn(st2, g2_p, bt2_p, n * length)

    # stage 3: folded BN2 + residual (1x1 projection only if channels differ) + ReLU
    if wr is not None:
        wr_p = jnp.pad(jnp.transpose(wr[:, :, 0], (1, 0)),
                       ((0, cin_p - cin), (0, cout_p - cout))).astype(jnp.bfloat16)
        br_p = pad_vec(br, cout_p).reshape(1, 1, cout_p)
    else:
        wr_p, br_p = None, None
    out_nlc = _finalize(h2, scale2, shift2, x_p, wr_p, br_p)

    return jnp.transpose(out_nlc[:, :, :cout], (0, 2, 1))    # back to NCL


def residual_block_ref(x, params):
    """Pure-JAX f32 reference of the PyTorch module (training-mode BN)."""
    w1, b1, g1, bt1, w2, b2, g2, bt2, wr, br = params

    def conv1d(h, w, b):
        y = jax.lax.conv_general_dilated(
            h, w, window_strides=(1,), padding=[(w.shape[-1] // 2,) * 2],
            dimension_numbers=("NCH", "OIH", "NCH"))
        return y + b[None, :, None]

    def bn(h, g, bt):
        mean = jnp.mean(h, axis=(0, 2), keepdims=True)
        var = jnp.mean(jnp.square(h - mean), axis=(0, 2), keepdims=True)
        return (h - mean) * jax.lax.rsqrt(var + EPS) * g[None, :, None] + bt[None, :, None]

    h = jax.nn.relu(bn(conv1d(x, w1, b1), g1, bt1))
    h = bn(conv1d(h, w2, b2), g2, bt2)
    res = x if wr is None else conv1d(x, wr, br)
    return jax.nn.relu(h + res)


def init_params(key, in_channels, out_channels, kernel_size=3):
    """Deterministic synthetic parameters matching the PyTorch module's shapes."""
    ks = jax.random.split(key, 6)
    s1 = 1.0 / jnp.sqrt(in_channels * kernel_size)
    s2 = 1.0 / jnp.sqrt(out_channels * kernel_size)
    w1 = jax.random.uniform(ks[0], (out_channels, in_channels, kernel_size),
                            minval=-s1, maxval=s1, dtype=jnp.float32)
    b1 = jax.random.uniform(ks[1], (out_channels,), minval=-s1, maxval=s1, dtype=jnp.float32)
    w2 = jax.random.uniform(ks[2], (out_channels, out_channels, kernel_size),
                            minval=-s2, maxval=s2, dtype=jnp.float32)
    b2 = jax.random.uniform(ks[3], (out_channels,), minval=-s2, maxval=s2, dtype=jnp.float32)
    g1 = jnp.ones((out_channels,), jnp.float32)
    bt1 = jnp.zeros((out_channels,), jnp.float32)
    g2 = jnp.ones((out_channels,), jnp.float32)
    bt2 = jnp.zeros((out_channels,), jnp.float32)
    if in_channels != out_channels:
        sr = 1.0 / jnp.sqrt(float(in_channels))
        wr = jax.random.uniform(ks[4], (out_channels, in_channels, 1),
                                minval=-sr, maxval=sr, dtype=jnp.float32)
        br = jax.random.uniform(ks[5], (out_channels,), minval=-sr, maxval=sr, dtype=jnp.float32)
    else:
        wr, br = None, None  # PyTorch skips the 1x1 conv; the kernel variant skips it too
    return (w1, b1, g1, bt1, w2, b2, g2, bt2, wr, br)


if __name__ == "__main__":
    key = jax.random.PRNGKey(0)
    k_x1, k_p1, k_x2, k_p2 = jax.random.split(key, 4)

    N, L = 2, 16

    # Case 1: Cin != Cout -> residual path uses the 1x1 projection kernel variant.
    Cin, Cout = 4, 8
    x1 = jax.random.normal(k_x1, (N, Cin, L), dtype=jnp.float32)
    p1 = init_params(k_p1, Cin, Cout)
    out1 = jax.block_until_ready(residual_block(x1, p1))
    ref1 = residual_block_ref(x1, p1)
    assert out1.shape == (N, Cout, L)
    assert bool(jnp.all(out1 >= 0.0))
    # loose tolerance: matmul operands + h1/h2 intermediates are bf16 (stats/acc are f32)
    assert float(jnp.max(jnp.abs(out1 - ref1))) < 0.3

    # Case 2: Cin == Cout -> identity shortcut; the 1x1 matmul is skipped entirely.
    x2 = jax.random.normal(k_x2, (N, Cout, L), dtype=jnp.float32)
    p2 = init_params(k_p2, Cout, Cout)
    out2 = jax.block_until_ready(residual_block(x2, p2))
    ref2 = residual_block_ref(x2, p2)
    assert out2.shape == (N, Cout, L)
    assert bool(jnp.all(out2 >= 0.0))
    assert float(jnp.max(jnp.abs(out2 - ref2))) < 0.3

    print("KERNEL_OK")
</pallas_src>

<mosaic_0001>
module attributes {stable_mosaic.version = 11 : i64} {
  func.func @_conv_stage_kernel(%arg0: i32, %arg1: memref<2x16x128xf32, #tpu.memory_space<vmem>>, %arg2: memref<3x128x128xbf16, #tpu.memory_space<vmem>>, %arg3: memref<2x16x128xbf16, #tpu.memory_space<vmem>>, %arg4: memref<1x2x128xf32, #tpu.memory_space<vmem>>) attributes {dimension_semantics = [#tpu.dimension_semantics<parallel>], iteration_bounds = array<i64: 1>, scalar_prefetch = 0 : i64, scratch_operands = 0 : i64, tpu.core_type = #tpu.core_type<tc>, window_params = [{transform_indices = @transform_0, window_bounds = array<i64: 2, 16, 128>}, {pipeline_mode = #tpu.pipeline_mode<synchronous>, transform_indices = @transform_1, window_bounds = array<i64: 3, 128, 128>}, {transform_indices = @transform_2, window_bounds = array<i64: 2, 16, 128>}, {transform_indices = @transform_3, window_bounds = array<i64: 1, 2, 128>}]} {
    %c0 = arith.constant 0 : index
    %c0_0 = arith.constant 0 : index
    %c0_1 = arith.constant 0 : index
    %0 = vector.load %arg1[%c0, %c0_0, %c0_1] : memref<2x16x128xf32, #tpu.memory_space<vmem>>, vector<2x16x128xf32>
    %1 = tpu.iota {dimensions = array<i32: 1>} : vector<2x16x128xi32>
    %c0_i32 = arith.constant 0 : i32
    %2 = vector.broadcast %c0_i32 : i32 to vector<2x16x128xi32>
    %3 = arith.cmpi eq, %1, %2 : vector<2x16x128xi32>
    %c1_i32 = arith.constant 1 : i32
    %4 = tpu.dynamic_rotate %0 by %c1_i32 dim 1 : vector<2x16x128xf32>, i32 -> vector<2x16x128xf32>
    %cst = arith.constant 0.000000e+00 : f32
    %5 = vector.broadcast %cst : f32 to vector<2x16x128xf32>
    %6 = arith.select %3, %5, %4 : vector<2x16x128xi1>, vector<2x16x128xf32>
    %c15_i32 = arith.constant 15 : i32
    %7 = vector.broadcast %c15_i32 : i32 to vector<2x16x128xi32>
    %8 = arith.cmpi eq, %1, %7 : vector<2x16x128xi32>
    %c15_i32_2 = arith.constant 15 : i32
    %9 = tpu.dynamic_rotate %0 by %c15_i32_2 dim 1 : vector<2x16x128xf32>, i32 -> vector<2x16x128xf32>
    %cst_3 = arith.constant 0.000000e+00 : f32
    %10 = vector.broadcast %cst_3 : f32 to vector<2x16x128xf32>
    %11 = arith.select %8, %10, %9 : vector<2x16x128xi1>, vector<2x16x128xf32>
    %12 = arith.truncf %6 : vector<2x16x128xf32> to vector<2x16x128xbf16>
    %c0_4 = arith.constant 0 : index
    %c0_5 = arith.constant 0 : index
    %c0_6 = arith.constant 0 : index
    %13 = vector.load %arg2[%c0_4, %c0_5, %c0_6] : memref<3x128x128xbf16, #tpu.memory_space<vmem>>, vector<1x128x128xbf16>
    %14 = vector.shape_cast %13 : vector<1x128x128xbf16> to vector<128x128xbf16>
    %cst_7 = arith.constant dense<0.000000e+00> : vector<2x16x128xf32>
    %15 = tpu.matmul %12, %14, %cst_7 {dimension_numbers = #tpu.dot_dimension_numbers<[2], [0], [0, 1], [1], [0, 0, 0, 1, 1, 1], [], []>} : vector<2x16x128xbf16>, vector<128x128xbf16>, vector<2x16x128xf32> -> vector<2x16x128xf32>
    %16 = arith.truncf %0 : vector<2x16x128xf32> to vector<2x16x128xbf16>
    %c1 = arith.constant 1 : index
    %c0_8 = arith.constant 0 : index
    %c0_9 = arith.constant 0 : index
    %17 = vector.load %arg2[%c1, %c0_8, %c0_9] : memref<3x128x128xbf16, #tpu.memory_space<vmem>>, vector<1x128x128xbf16>
    %18 = vector.shape_cast %17 : vector<1x128x128xbf16> to vector<128x128xbf16>
    %cst_10 = arith.constant dense<0.000000e+00> : vector<2x16x128xf32>
    %19 = tpu.matmul %16, %18, %cst_10 {dimension_numbers = #tpu.dot_dimension_numbers<[2], [0], [0, 1], [1], [0, 0, 0, 1, 1, 1], [], []>} : vector<2x16x128xbf16>, vector<128x128xbf16>, vector<2x16x128xf32> -> vector<2x16x128xf32>
    %20 = arith.addf %15, %19 : vector<2x16x128xf32>
    %21 = arith.truncf %11 : vector<2x16x128xf32> to vector<2x16x128xbf16>
    %c2 = arith.constant 2 : index
    %c0_11 = arith.constant 0 : index
    %c0_12 = arith.constant 0 : index
    %22 = vector.load %arg2[%c2, %c0_11, %c0_12] : memref<3x128x128xbf16, #tpu.memory_space<vmem>>, vector<1x128x128xbf16>
    %23 = vector.shape_cast %22 : vector<1x128x128xbf16> to vector<128x128xbf16>
    %cst_13 = arith.constant dense<0.000000e+00> : vector<2x16x128xf32>
    %24 = tpu.matmul %21, %23, %cst_13 {dimension_numbers = #tpu.dot_dimension_numbers<[2], [0], [0, 1], [1], [0, 0, 0, 1, 1, 1], [], []>} : vector<2x16x128xbf16>, vector<128x128xbf16>, vector<2x16x128xf32> -> vector<2x16x128xf32>
    %25 = arith.addf %20, %24 : vector<2x16x128xf32>
    %26 = arith.truncf %25 : vector<2x16x128xf32> to vector<2x16x128xbf16>
    %c0_14 = arith.constant 0 : index
    %c0_15 = arith.constant 0 : index
    %c0_16 = arith.constant 0 : index
    %27 = vector.load %arg3[%c0_14, %c0_15, %c0_16] : memref<2x16x128xbf16, #tpu.memory_space<vmem>>, vector<2x16x128xbf16>
    tpu.vector_store %arg3[%c0_14, %c0_15, %c0_16], %26 {strides = array<i32>} : memref<2x16x128xbf16, #tpu.memory_space<vmem>>, vector<2x16x128xbf16>,
    %cst_17 = arith.constant dense<0.000000e+00> : vector<128xf32>
    %28 = vector.multi_reduction <add>, %25, %cst_17 [0, 1] : vector<2x16x128xf32> to vector<128xf32>
    %29 = vector.shape_cast %28 : vector<128xf32> to vector<1x1x128xf32>
    %30 = arith.mulf %25, %25 : vector<2x16x128xf32>
    %cst_18 = arith.constant dense<0.000000e+00> : vector<128xf32>
    %31 = vector.multi_reduction <add>, %30, %cst_18 [0, 1] : vector<2x16x128xf32> to vector<128xf32>
    %32 = vector.shape_cast %31 : vector<128xf32> to vector<1x1x128xf32>
    %33 = tpu.concatenate %29, %32 in 1 : vector<1x1x128xf32>, vector<1x1x128xf32> -> vector<1x2x128xf32>
    %c0_19 = arith.constant 0 : index
    %c0_20 = arith.constant 0 : index
    %c0_21 = arith.constant 0 : index
    %34 = vector.load %arg4[%c0_19, %c0_20, %c0_21] : memref<1x2x128xf32, #tpu.memory_space<vmem>>, vector<1x2x128xf32>
    tpu.vector_store %arg4[%c0_19, %c0_20, %c0_21], %33 {strides = array<i32>} : memref<1x2x128xf32, #tpu.memory_space<vmem>>, vector<1x2x128xf32>,
    return
  }
  func.func @transform_0(%arg0: i32) -> (i32, i32, i32) {
    %c0_i32 = arith.constant 0 : i32
    %c0_i32_0 = arith.constant 0 : i32
    %c0_i32_1 = arith.constant 0 : i32
    return %arg0, %c0_i32, %c0_i32_0 : i32, i32, i32
  }
  func.func @transform_1(%arg0: i32) -> (i32, i32, i32) {
    %c0_i32 = arith.constant 0 : i32
    %c0_i32_0 = arith.constant 0 : i32
    %c0_i32_1 = arith.constant 0 : i32
    %c0_i32_2 = arith.constant 0 : i32
    return %c0_i32, %c0_i32_0, %c0_i32_1 : i32, i32, i32
  }
  func.func @transform_2(%arg0: i32) -> (i32, i32, i32) {
    %c0_i32 = arith.constant 0 : i32
    %c0_i32_0 = arith.constant 0 : i32
    %c0_i32_1 = arith.constant 0 : i32
    return %arg0, %c0_i32, %c0_i32_0 : i32, i32, i32
  }
  func.func @transform_3(%arg0: i32) -> (i32, i32, i32) {
    %c0_i32 = arith.constant 0 : i32
    %c0_i32_0 = arith.constant 0 : i32
    %c0_i32_1 = arith.constant 0 : i32
    return %arg0, %c0_i32, %c0_i32_0 : i32, i32, i32
  }
}

</mosaic_0001>

<llo_original>
// kernel: tpu_custom_call.1
$region0: #{tpu_custom_call.1}
  #allocation0 [shape = 'u32[]', space=smem, size = 0x4, offset = 0x4, fixed_abs, tag = 'smem constant byte address 0x4 - core index']
  #allocation1 [shape = 'u32[72,128]{1,0:T(1,128)}', space=vmem, size = 0x9000, scoped, tag = 'internal scratch']
  %s0 = inlined_call_operand.hbm [shape: f32[2,16,128], index: 0, kind: input, shape index: {}]
  %s1 = inlined_call_operand.hbm [shape: bf16[3,128,128], index: 1, kind: input, shape index: {}]
  %s2 = inlined_call_operand.hbm [shape: bf16[2,16,128], index: 2, kind: output, shape index: {0}]
  %s3 = inlined_call_operand.hbm [shape: f32[1,2,128], index: 3, kind: output, shape index: {1}]
  %4 = xla_tuple %s2, %s3
  %s5 = sld [smem:[#allocation0]]
  $region34: #{tpu_custom_call.1} parent=0
    _
  %s7 = ssub.s32 1, %s5
  %s8 = scalar_select 0, %s7, %s5
  $region1: #{tpu_custom_call.1} parent=0
    #allocation2 [shape = 'u8[16384]{0}', space=vmem, size = 0x4000, scoped, tag = 'input window, operand 0, single buffered']
    #allocation3 [shape = 's32[1]{0}', space=sflag, size = 0x4, scoped, tag = 'scoped memory for tpu_custom_call.1']
    #allocation4 [shape = 's32[1]{0}', space=sflag, size = 0x4, scoped, tag = 'scoped memory for tpu_custom_call.1']
    #allocation5 [shape = 'u8[98304]{0}', space=vmem, size = 0x18000, scoped, tag = 'input window, operand 1, single buffered']
    #allocation6 [shape = 's32[1]{0}', space=sflag, size = 0x4, scoped, tag = 'scoped memory for tpu_custom_call.1']
    #allocation7 [shape = 'u8[8192]{0}', space=vmem, size = 0x2000, scoped, tag = 'output window, operand 0, single buffered']
    #allocation8 [shape = 'u8[1024]{0}', space=vmem, size = 0x400, scoped, tag = 'output window, operand 1, single buffered']
    #allocation9 [shape = 's32[1]{0}', space=sflag, size = 0x4, scoped, tag = 'scoped memory for tpu_custom_call.1']
    %9 = vsyncpa [#allocation3], 0
    %10 = vsyncpa [#allocation6], 0
    %11 = vsyncpa [#allocation4], 0
    %12 = vsyncpa [#allocation9], 0
    // Predicated region
    $region2: #{tpu_custom_call.1} parent=1 // pred_check
      _
    $region3: #{tpu_custom_call.1} parent=1 // pred_check_branch
      %14 = sbr.rel (0) target = $region5
    $region4: #{tpu_custom_call.1} parent=1 // pred_region
      %16 = vsyncadd [#allocation3], 0
      %s17 = sshll.u32 %s0, 4
      %s18 = int_to_ptr.hbm [resolvable:$true] %s17
      %s19 = sshll.u32 [#allocation2], 4
      %s20 = int_to_ptr.vmem [resolvable:$true] %s19
      %25 = dma.hbm_to_vmem [thread:$0]  %s18, 512, %s20, [#allocation3], 128, 128, 8
    $region5: #{tpu_custom_call.1} parent=1 // pred_fallthru
      _
    // Predicated region
    $region6: #{tpu_custom_call.1} parent=1 // pred_check
      _
    $region7: #{tpu_custom_call.1} parent=1 // pred_check_branch
      %27 = sbr.rel (0) target = $region9
    $region8: #{tpu_custom_call.1} parent=1 // pred_region
      %29 = vsyncadd [#allocation6], 0
      %s30 = sshll.u32 %s1, 4
      %s31 = int_to_ptr.hbm [resolvable:$true] %s30
      %s32 = sshll.u32 [#allocation5], 4
      %s33 = int_to_ptr.vmem [resolvable:$true] %s32
      %38 = dma.hbm_to_vmem [thread:$0]  %s31, 3072, %s33, [#allocation6], 64, 64, 4
    $region9: #{tpu_custom_call.1} parent=1 // pred_fallthru
      _
    // Predicated region
    $region10: #{tpu_custom_call.1} parent=1 // pred_check
      _
    $region11: #{tpu_custom_call.1} parent=1 // pred_check_branch
      %40 = sbr.rel (0) target = $region13
    $region12: #{tpu_custom_call.1} parent=1 // pred_region
      %42 = dma.done [#allocation3], 512
    $region13: #{tpu_custom_call.1} parent=1 // pred_fallthru
      _
    // Predicated region
    $region14: #{tpu_custom_call.1} parent=1 // pred_check
      _
    $region15: #{tpu_custom_call.1} parent=1 // pred_check_branch
      %44 = sbr.rel (0) target = $region17
    $region16: #{tpu_custom_call.1} parent=1 // pred_region
      %46 = dma.done [#allocation6], 3072
    $region17: #{tpu_custom_call.1} parent=1 // pred_fallthru
      _
    %v47 = vld [vmem:[#allocation2] sm:$0xff]
    %v48 = vld [vmem:[#allocation2 + $0x8] sm:$0xff]
    %v49 = vld [vmem:[#allocation2 + $0x10] sm:$0xff]
    %v50 = vld [vmem:[#allocation2 + $0x18] sm:$0xff]
    %v51 = vlaneseq
    %v52 = vshrl.u32 %v51, 7
    %v53 = vadd.s32 %v52, 8
    %vm54 = vcmp.eq.s32.totalorder %v52, 0
    %vm55 = vcmp.eq.s32.totalorder %v53, 0
    %v56 = vrot.slane %v47, 7
    %v57 = vrot.slane %v49, 7
    %v58 = vrot.slane %v48, 7
    %v59 = vrot.slane %v50, 7
    %vm60 = vcmp.lt.s32.totalorder %v52, 1
    %v61 = vsel %vm60, %v56, %v58
    %v62 = vsel %vm60, %v57, %v59
    %v63 = vsel %vm60, %v58, %v56
    %v64 = vsel %vm60, %v59, %v57
    %v65 = vsel %vm54, 0.0, %v63
    %v66 = vsel %vm55, 0.0, %v61
    %v67 = vsel %vm54, 0.0, %v64
    %v68 = vsel %vm55, 0.0, %v62
    %vm69 = vcmp.eq.s32.totalorder %v52, 15
    %vm70 = vcmp.eq.s32.totalorder %v53, 15
    %v71 = vrot.slane %v47, 1
    %v72 = vrot.slane %v49, 1
    %v73 = vrot.slane %v48, 1
    %v74 = vrot.slane %v50, 1
    %vm75 = vcmp.lt.s32.totalorder %v52, 7
    %v76 = vsel %vm75, %v71, %v73
    %v77 = vsel %vm75, %v72, %v74
    %v78 = vsel %vm75, %v73, %v71
    %v79 = vsel %vm75, %v74, %v72
    %v80 = vsel %vm69, 0.0, %v76
    %v81 = vsel %vm70, 0.0, %v78
    %v82 = vsel %vm69, 0.0, %v77
    %v83 = vsel %vm70, 0.0, %v79
    %v84 = vpack.c.bf16 %v65, %v65
    %v85 = vpack.c.bf16 %v66, %v66
    %v86 = vpack.c.bf16 %v67, %v67
    %v87 = vpack.c.bf16 %v68, %v68
    %v88 = vld [vmem:[#allocation5] sm:$0xf]
    %v89 = vld [vmem:[#allocation5 + $0x4] sm:$0xf]
    %v90 = vld [vmem:[#allocation5 + $0x8] sm:$0xf]
    %v91 = vld [vmem:[#allocation5 + $0xc] sm:$0xf]
    %v92 = vld [vmem:[#allocation5 + $0x10] sm:$0xf]
    %v93 = vld [vmem:[#allocation5 + $0x14] sm:$0xf]
    %v94 = vld [vmem:[#allocation5 + $0x18] sm:$0xf]
    %v95 = vld [vmem:[#allocation5 + $0x1c] sm:$0xf]
    %v96 = vld [vmem:[#allocation5 + $0x20] sm:$0xf]
    %v97 = vld [vmem:[#allocation5 + $0x24] sm:$0xf]
    %v98 = vld [vmem:[#allocation5 + $0x28] sm:$0xf]
    %v99 = vld [vmem:[#allocation5 + $0x2c] sm:$0xf]
    %v100 = vld [vmem:[#allocation5 + $0x30] sm:$0xf]
    %v101 = vld [vmem:[#allocation5 + $0x34] sm:$0xf]
    %v102 = vld [vmem:[#allocation5 + $0x38] sm:$0xf]
    %v103 = vld [vmem:[#allocation5 + $0x3c] sm:$0xf]
    %v104 = vpack.c.bf16 %v47, %v47
    %v105 = vpack.c.bf16 %v48, %v48
    %v106 = vpack.c.bf16 %v49, %v49
    %v107 = vpack.c.bf16 %v50, %v50
    %s108 = scalar_lea.vmem [#allocation5], 64
    %v109 = vld [vmem:[%s108] sm:$0xf]
    %v110 = vld [vmem:[%s108 + $0x4] sm:$0xf]
    %v111 = vld [vmem:[%s108 + $0x8] sm:$0xf]
    %v112 = vld [vmem:[%s108 + $0xc] sm:$0xf]
    %v113 = vld [vmem:[%s108 + $0x10] sm:$0xf]
    %v114 = vld [vmem:[%s108 + $0x14] sm:$0xf]
    %v115 = vld [vmem:[%s108 + $0x18] sm:$0xf]
    %v116 = vld [vmem:[%s108 + $0x1c] sm:$0xf]
    %v117 = vld [vmem:[%s108 + $0x20] sm:$0xf]
    %v118 = vld [vmem:[%s108 + $0x24] sm:$0xf]
    %v119 = vld [vmem:[%s108 + $0x28] sm:$0xf]
    %v120 = vld [vmem:[%s108 + $0x2c] sm:$0xf]
    %v121 = vld [vmem:[%s108 + $0x30] sm:$0xf]
    %v122 = vld [vmem:[%s108 + $0x34] sm:$0xf]
    %v123 = vld [vmem:[%s108 + $0x38] sm:$0xf]
    %v124 = vld [vmem:[%s108 + $0x3c] sm:$0xf]
    %v129 = vunpack.c.l.b16 %v104
    %v130 = vunpack.c.l.b16 %v105
    %v131 = vunpack.c.l.b16 %v106
    %v132 = vunpack.c.l.b16 %v107
    %v133 = vpack.c.b16 %v130, %v129
    %v134 = vpack.c.b16 %v132, %v131
    %v153 = vunpack.c.l.b16 %v109
    %v154 = vunpack.c.l.b16 %v110
    %v155 = vunpack.c.l.b16 %v111
    %v156 = vunpack.c.l.b16 %v112
    %v157 = vunpack.c.l.b16 %v113
    %v158 = vunpack.c.l.b16 %v114
    %v159 = vunpack.c.l.b16 %v115
    %v160 = vunpack.c.l.b16 %v116
    %v161 = vunpack.c.l.b16 %v117
    %v162 = vunpack.c.l.b16 %v118
    %v163 = vunpack.c.l.b16 %v119
    %v164 = vunpack.c.l.b16 %v120
    %v165 = vunpack.c.l.b16 %v121
    %v166 = vunpack.c.l.b16 %v122
    %v167 = vunpack.c.l.b16 %v123
    %v168 = vunpack.c.l.b16 %v124
    %v169 = vpack.c.b16 %v154, %v153
    %v170 = vpack.c.b16 %v156, %v155
    %v171 = vpack.c.b16 %v158, %v157
    %v172 = vpack.c.b16 %v160, %v159
    %v173 = vpack.c.b16 %v162, %v161
    %v174 = vpack.c.b16 %v164, %v163
    %v175 = vpack.c.b16 %v166, %v165
    %v176 = vpack.c.b16 %v168, %v167
    %185 = vmatpush.bf16.msra.mxu0 %v176
    %186 = vmatpush.bf16.msra.mxu0 %v175
    %187 = vmatpush.bf16.msra.mxu0 %v174
    %188 = vmatpush.bf16.msra.mxu0 %v173
    %189 = vmatpush.bf16.msra.mxu0 %v172
    %190 = vmatpush.bf16.msra.mxu0 %v171
    %191 = vmatpush.bf16.msra.mxu0 %v170
    %192 = vmatpush.bf16.msra.mxu0 %v169
    %193 = vmatmul.bf16.gmra.mxu0 %v133
    %v194 = vpop.f32.mrf.mxu0
    %v195 = vadd.f32 0.0, %v194
    %v196 = vpop.f32.mrf.mxu0
    %v197 = vadd.f32 0.0, %v196
    %198 = vmatmul.bf16.gmra.mxu0 %v134
    %v199 = vpop.f32.mrf.mxu0
    %v200 = vadd.f32 0.0, %v199
    %v201 = vpop.f32.mrf.mxu0
    %v202 = vadd.f32 0.0, %v201
    %203 = vdwg.mxu0
    %v208 = vunpack.c.l.b16 %v84
    %v209 = vunpack.c.l.b16 %v85
    %v210 = vunpack.c.l.b16 %v86
    %v211 = vunpack.c.l.b16 %v87
    %v212 = vpack.c.b16 %v209, %v208
    %v213 = vpack.c.b16 %v211, %v210
    %v232 = vunpack.c.l.b16 %v88
    %v233 = vunpack.c.l.b16 %v89
    %v234 = vunpack.c.l.b16 %v90
    %v235 = vunpack.c.l.b16 %v91
    %v236 = vunpack.c.l.b16 %v92
    %v237 = vunpack.c.l.b16 %v93
    %v238 = vunpack.c.l.b16 %v94
    %v239 = vunpack.c.l.b16 %v95
    %v240 = vunpack.c.l.b16 %v96
    %v241 = vunpack.c.l.b16 %v97
    %v242 = vunpack.c.l.b16 %v98
    %v243 = vunpack.c.l.b16 %v99
    %v244 = vunpack.c.l.b16 %v100
    %v245 = vunpack.c.l.b16 %v101
    %v246 = vunpack.c.l.b16 %v102
    %v247 = vunpack.c.l.b16 %v103
    %v248 = vpack.c.b16 %v233, %v232
    %v249 = vpack.c.b16 %v235, %v234
    %v250 = vpack.c.b16 %v237, %v236
    %v251 = vpack.c.b16 %v239, %v238
    %v252 = vpack.c.b16 %v241, %v240
    %v253 = vpack.c.b16 %v243, %v242
    %v254 = vpack.c.b16 %v245, %v244
    %v255 = vpack.c.b16 %v247, %v246
    %264 = vmatpush.bf16.msra.mxu0 %v255
    %265 = vmatpush.bf16.msra.mxu0 %v254
    %266 = vmatpush.bf16.msra.mxu0 %v253
    %267 = vmatpush.bf16.msra.mxu0 %v252
    %268 = vmatpush.bf16.msra.mxu0 %v251
    %269 = vmatpush.bf16.msra.mxu0 %v250
    %270 = vmatpush.bf16.msra.mxu0 %v249
    %271 = vmatpush.bf16.msra.mxu0 %v248
    %272 = vmatmul.bf16.gmra.mxu0 %v212
    %v273 = vpop.f32.mrf.mxu0
    %v274 = vadd.f32 %v195, %v273
    %v275 = vpop.f32.mrf.mxu0
    %v276 = vadd.f32 %v197, %v275
    %277 = vmatmul.bf16.gmra.mxu0 %v213
    %v278 = vpop.f32.mrf.mxu0
    %v279 = vadd.f32 %v200, %v278
    %v280 = vpop.f32.mrf.mxu0
    %v281 = vadd.f32 %v202, %v280
    %282 = vdwg.mxu0
    %v283 = vpack.c.bf16 %v80, %v80
    %v284 = vpack.c.bf16 %v81, %v81
    %v285 = vpack.c.bf16 %v82, %v82
    %v286 = vpack.c.bf16 %v83, %v83
    %s287 = scalar_lea.vmem [#allocation5], 128
    %v288 = vld [vmem:[%s287] sm:$0xf]
    %v289 = vld [vmem:[%s287 + $0x4] sm:$0xf]
    %v290 = vld [vmem:[%s287 + $0x8] sm:$0xf]
    %v291 = vld [vmem:[%s287 + $0xc] sm:$0xf]
    %v292 = vld [vmem:[%s287 + $0x10] sm:$0xf]
    %v293 = vld [vmem:[%s287 + $0x14] sm:$0xf]
    %v294 = vld [vmem:[%s287 + $0x18] sm:$0xf]
    %v295 = vld [vmem:[%s287 + $0x1c] sm:$0xf]
    %v296 = vld [vmem:[%s287 + $0x20] sm:$0xf]
    %v297 = vld [vmem:[%s287 + $0x24] sm:$0xf]
    %v298 = vld [vmem:[%s287 + $0x28] sm:$0xf]
    %v299 = vld [vmem:[%s287 + $0x2c] sm:$0xf]
    %v300 = vld [vmem:[%s287 + $0x30] sm:$0xf]
    %v301 = vld [vmem:[%s287 + $0x34] sm:$0xf]
    %v302 = vld [vmem:[%s287 + $0x38] sm:$0xf]
    %v303 = vld [vmem:[%s287 + $0x3c] sm:$0xf]
    %v308 = vunpack.c.l.b16 %v283
    %v309 = vunpack.c.l.b16 %v284
    %v310 = vunpack.c.l.b16 %v285
    %v311 = vunpack.c.l.b16 %v286
    %v312 = vpack.c.b16 %v309, %v308
    %v313 = vpack.c.b16 %v311, %v310
    %v332 = vunpack.c.l.b16 %v288
    %v333 = vunpack.c.l.b16 %v289
    %v334 = vunpack.c.l.b16 %v290
    %v335 = vunpack.c.l.b16 %v291
    %v336 = vunpack.c.l.b16 %v292
    %v337 = vunpack.c.l.b16 %v293
    %v338 = vunpack.c.l.b16 %v294
    %v339 = vunpack.c.l.b16 %v295
    %v340 = vunpack.c.l.b16 %v296
    %v341 = vunpack.c.l.b16 %v297
    %v342 = vunpack.c.l.b16 %v298
    %v343 = vunpack.c.l.b16 %v299
    %v344 = vunpack.c.l.b16 %v300
    %v345 = vunpack.c.l.b16 %v301
    %v346 = vunpack.c.l.b16 %v302
    %v347 = vunpack.c.l.b16 %v303
    %v348 = vpack.c.b16 %v333, %v332
    %v349 = vpack.c.b16 %v335, %v334
    %v350 = vpack.c.b16 %v337, %v336
    %v351 = vpack.c.b16 %v339, %v338
    %v352 = vpack.c.b16 %v341, %v340
    %v353 = vpack.c.b16 %v343, %v342
    %v354 = vpack.c.b16 %v345, %v344
    %v355 = vpack.c.b16 %v347, %v346
    %364 = vmatpush.bf16.msra.mxu0 %v355
    %365 = vmatpush.bf16.msra.mxu0 %v354
    %366 = vmatpush.bf16.msra.mxu0 %v353
    %367 = vmatpush.bf16.msra.mxu0 %v352
    %368 = vmatpush.bf16.msra.mxu0 %v351
    %369 = vmatpush.bf16.msra.mxu0 %v350
    %370 = vmatpush.bf16.msra.mxu0 %v349
    %371 = vmatpush.bf16.msra.mxu0 %v348
    %372 = vmatmul.bf16.gmra.mxu0 %v312
    %v373 = vpop.f32.mrf.mxu0
    %v374 = vadd.f32 0.0, %v373
    %v375 = vpop.f32.mrf.mxu0
    %v376 = vadd.f32 0.0, %v375
    %377 = vmatmul.bf16.gmra.mxu0 %v313
    %v378 = vpop.f32.mrf.mxu0
    %v379 = vadd.f32 0.0, %v378
    %v380 = vpop.f32.mrf.mxu0
    %v381 = vadd.f32 0.0, %v380
    %382 = vdwg.mxu0
    %v383 = vadd.f32 %v274, %v374
    %v384 = vadd.f32 %v276, %v376
    %v385 = vadd.f32 %v279, %v379
    %v386 = vadd.f32 %v281, %v381
    %v387 = vpack.c.bf16 %v383, %v383
    %v388 = vpack.c.bf16 %v384, %v384
    %v389 = vpack.c.bf16 %v385, %v385
    %v390 = vpack.c.bf16 %v386, %v386
    %391 = vst [vmem:[#allocation7] sm:$0xf] %v387
    %392 = vst [vmem:[#allocation7 + $0x4] sm:$0xf] %v388
    %393 = vst [vmem:[#allocation7 + $0x8] sm:$0xf] %v389
    %394 = vst [vmem:[#allocation7 + $0xc] sm:$0xf] %v390
    %v395 = vadd.f32 %v383, %v384
    %v396 = vadd.f32 %v395, %v385
    %v397 = vadd.f32 %v396, %v386
    %v398 = vrot.slane %v397, 4
    %v399 = vadd.f32 %v397, %v398
    %v400 = vrot.slane %v399, 2
    %v401 = vadd.f32 %v399, %v400
    %v402 = vrot.slane %v401, 1
    %v403 = vadd.f32 %v401, %v402
    %v404 = vmul.f32 %v383, %v383
    %v405 = vmul.f32 %v384, %v384
    %v406 = vmul.f32 %v385, %v385
    %v407 = vmul.f32 %v386, %v386
    %v408 = vadd.f32 %v404, %v405
    %v409 = vadd.f32 %v408, %v406
    %v410 = vadd.f32 %v409, %v407
    %v411 = vrot.slane %v410, 4
    %v412 = vadd.f32 %v410, %v411
    %v413 = vrot.slane %v412, 2
    %v414 = vadd.f32 %v412, %v413
    %v415 = vrot.slane %v414, 1
    %v416 = vadd.f32 %v414, %v415
    %vm417 = vcmask 1040384
    %v418 = vsel %vm417, %v403, %v416
    %419 = vst [vmem:[#allocation8] sm:$0x3] %v418
    // Predicated region
    $region18: #{tpu_custom_call.1} parent=1 // pred_check
      _
    $region19: #{tpu_custom_call.1} parent=1 // pred_check_branch
      %421 = sbr.rel (0) target = $region21
    $region20: #{tpu_custom_call.1} parent=1 // pred_region
      %423 = vsyncadd [#allocation4], 0
      %s424 = sshll.u32 [#allocation7], 4
      %s425 = int_to_ptr.vmem [resolvable:$true] %s424
      %s426 = sshll.u32 %s2, 4
      %s427 = int_to_ptr.hbm [resolvable:$true] %s426
      %432 = dma.vmem_to_hbm [thread:$0]  %s425, 256, %s427, [#allocation4], 64, 64, 4
    $region21: #{tpu_custom_call.1} parent=1 // pred_fallthru
      _
    // Predicated region
    $region22: #{tpu_custom_call.1} parent=1 // pred_check
      _
    $region23: #{tpu_custom_call.1} parent=1 // pred_check_branch
      %434 = sbr.rel (0) target = $region25
    $region24: #{tpu_custom_call.1} parent=1 // pred_region
      %436 = vsyncadd [#allocation9], 0
      %s438 = sshll.u32 [#allocation8], 4
      %s439 = int_to_ptr.vmem [resolvable:$true] %s438
      %s440 = sshll.u32 %s3, 4
      %s441 = int_to_ptr.hbm [resolvable:$true] %s440
      %443 = dma.vmem_to_hbm [thread:$0]  %s439, 32, %s441, [#allocation9]
    $region25: #{tpu_custom_call.1} parent=1 // pred_fallthru
      _
    // Predicated region
    $region26: #{tpu_custom_call.1} parent=1 // pred_check
      _
    $region27: #{tpu_custom_call.1} parent=1 // pred_check_branch
      %445 = sbr.rel (0) target = $region29
    $region28: #{tpu_custom_call.1} parent=1 // pred_region
      %447 = dma.done [#allocation4], 256
    $region29: #{tpu_custom_call.1} parent=1 // pred_fallthru
      _
    // Predicated region
    $region30: #{tpu_custom_call.1} parent=1 // pred_check
      _
    $region31: #{tpu_custom_call.1} parent=1 // pred_check_branch
      %449 = sbr.rel (0) target = $region33
    $region32: #{tpu_custom_call.1} parent=1 // pred_region
      %451 = dma.done [#allocation9], 32
    $region33: #{tpu_custom_call.1} parent=1 // pred_fallthru
      _
    %452 = vsyncpa [#allocation3], 1
    %453 = vsyncpa [#allocation6], 1
    %454 = vsyncpa [#allocation4], 1
    %455 = vsyncpa [#allocation9], 1

</llo_original>
